<compile_context>
chip_gen: v5e
topology: v5e:2x2
jax: 0.10.0
libtpu: 0.0.40
codegen_flags: <defaults>
</compile_context>

<pallas_src>
from functools import partial

import numpy as np

import jax
import jax.numpy as jnp
from jax import lax
from jax.experimental import pallas as pl
from jax.experimental.pallas import tpu as pltpu


def _generator_block_kernel(
    x_ref, wf1_ref, wf2_ref, gamma_ref, beta_ref, S_ref, ST_ref, b2_ref, mask_ref,
    alpha_ref,                                   # SMEM scalar
    out_ref,                                     # (Rp-2, OW) f32 output
    act_ref,                                     # VMEM scratch (Rp, OW) bf16 (conv2 input)
    *, Rp, OW, Cout, count, eps):
  R = Rp - 2

  # ---- conv1: one wide MXU call (3 ky taps concatenated along the output axis) -----
  x = x_ref[...]                                                     # (Rp, W*Cin) bf16
  F = jnp.dot(x, wf1_ref[...], preferred_element_type=jnp.float32)   # (Rp, 3*OW) f32
  f0, f1, f2 = F[:, :OW], F[:, OW:2 * OW], F[:, 2 * OW:]

  # Whole-slab row-shifted tap combine: row j of `y1` is padded row j+1.
  # mask is 1 on per-image interior rows, 0 on halo / tail rows.
  mask = mask_ref[...]                                               # (R, 1) f32
  y1 = (f0[0:R] + f1[1:R + 1] + f2[2:R + 2]) * mask                  # (R, OW) f32
  # (conv1 bias omitted: it cancels exactly under training-mode BatchNorm.)

  # ---- BatchNorm statistics (biased variance, training mode), fused in-vreg --------
  rowsel = lax.broadcasted_iota(jnp.int32, (2, OW), 0) == 0
  s_stack = jnp.where(rowsel,
                      jnp.sum(y1, axis=0, keepdims=True),            # row 0: sum
                      jnp.sum(y1 * y1, axis=0, keepdims=True))       # row 1: sum of sq
  chan = jnp.dot(s_stack, S_ref[...], preferred_element_type=jnp.float32)  # (2, Cout)
  inv_count = 1.0 / count
  mean = chan[0:1] * inv_count
  var = jnp.maximum(chan[1:2] * inv_count - mean * mean, 0.0)        # clamp: no NaN rsqrt
  inv = lax.rsqrt(var + eps)
  scale_c = gamma_ref[...] * inv                                     # (1, Cout)
  shift_c = beta_ref[...] - scale_c * mean                           # (1, Cout)
  rowsel_c = lax.broadcasted_iota(jnp.int32, (2, Cout), 0) == 0
  sb = jnp.dot(jnp.where(rowsel_c, scale_c, shift_c), ST_ref[...],
               preferred_element_type=jnp.float32)                   # (2, OW)
  scale, shift = sb[0:1], sb[1:2]

  # ---- normalize + PReLU (single fused pass), masked so halo rows stay exactly 0 ---
  alpha = alpha_ref[0]
  y2 = y1 * scale + shift
  y3 = jnp.where(y2 >= 0.0, y2, alpha * y2) * mask

  # bf16 activation scratch in padded-row layout; rows 0 and Rp-1 are conv2's row halo.
  act_ref[...] = jnp.zeros_like(act_ref)
  act_ref[1:R + 1, :] = y3.astype(act_ref.dtype)

  # ---- conv2: same single-wide-dot + row-shifted combine; b2 added once ------------
  a = act_ref[...]                                                   # (Rp, OW) bf16
  G = jnp.dot(a, wf2_ref[...], preferred_element_type=jnp.float32)   # (Rp, 3*OW) f32
  g0, g1, g2 = G[:, :OW], G[:, OW:2 * OW], G[:, 2 * OW:]
  out_ref[...] = g0[0:R] + g1[1:R + 1] + g2[2:R + 2] + b2_ref[...]


def _fold_kx_taps(w_hwio, W):
  """HWIO (3,3,Ci,Co) -> (W*Ci, 3*W*Co).

  For each ky, build the matrix mapping one unpadded input row (W*Ci lanes) to its
  contribution to one output row (W*Co lanes), with the kx shifts and the SAME-padding
  kx boundary clipping folded in as zero columns; concatenate the 3 ky matrices along
  the output axis so each conv is a single wide matmul."""
  _, _, Ci, Co = w_hwio.shape
  mats = []
  for ky in range(3):
    m = jnp.zeros((W * Ci, W * Co), jnp.float32)
    for kx in range(3):
      sel = np.zeros((W, W), np.float32)
      for ow in range(W):
        iw = ow + kx - 1
        if 0 <= iw < W:
          sel[iw, ow] = 1.0
      m = m + jnp.kron(jnp.asarray(sel), w_hwio[ky, kx].astype(jnp.float32))
    mats.append(m)
  return jnp.concatenate(mats, axis=1)


@partial(jax.jit, static_argnames=("eps",))
def generator_block(x_nchw, w1, b1, gamma, beta, alpha, w2, b2, eps=1e-5):
  """x_nchw: (N, Cin, H, W); w1: (3,3,Cin,Cout) HWIO; w2: (3,3,Cout,Cout) HWIO.
  b1 is accepted for interface parity but is mathematically redundant: the conv1 bias
  cancels exactly under the training-mode BatchNorm that follows it.  Accuracy note:
  x / weights / the conv2 input activation are bf16 (MXU operands, f32 accumulation);
  all BN / PReLU elementwise math is f32."""
  del b1
  x_nchw = x_nchw.astype(jnp.float32)
  N, Cin, H, W = x_nchw.shape
  Cout = w2.shape[-1]
  Hp = H + 2
  OW = W * Cout                       # unpadded lane width (128 at the test sizes)
  Rp = -(-(N * Hp) // 8) * 8          # padded-row slab rows, rounded up to 8 sublanes
  R = Rp - 2

  # ---- host-side layout plumbing / parameter packing (one-time, not hot path) ------
  x_nhwc = jnp.transpose(x_nchw, (0, 2, 3, 1))
  x_pad = jnp.pad(x_nhwc, ((0, 0), (1, 1), (0, 0), (0, 0)))           # row halo only
  x2d = x_pad.reshape(N * Hp, W * Cin)
  x2d = jnp.pad(x2d, ((0, Rp - N * Hp), (0, 0))).astype(jnp.bfloat16)  # (Rp, W*Cin)

  wf1 = _fold_kx_taps(w1, W).astype(jnp.bfloat16)                    # (W*Cin, 3*OW)
  wf2 = _fold_kx_taps(w2, W).astype(jnp.bfloat16)                    # (OW,    3*OW)

  gamma_c = gamma.astype(jnp.float32).reshape(1, Cout)
  beta_c = beta.astype(jnp.float32).reshape(1, Cout)
  b2_row = jnp.tile(b2.astype(jnp.float32), W).reshape(1, OW)
  alpha1 = jnp.asarray(alpha, jnp.float32).reshape(1)
  S = jnp.tile(jnp.eye(Cout, dtype=jnp.float32), (W, 1))             # (OW, Cout)
  ST = S.T                                                           # (Cout, OW)

  # interior-row mask for rows 1..Rp-2 of the padded-row layout
  rows_mid = np.arange(R) + 1
  rin = rows_mid % Hp
  interior = (rows_mid < N * Hp) & (rin >= 1) & (rin <= H)
  mask = jnp.asarray(interior.astype(np.float32).reshape(R, 1))

  # VMEM budget: resident bytes + fixed headroom; cap is generation-aware.
  resident = (x2d.size * 2 + wf1.size * 2 + wf2.size * 2
              + Rp * OW * 2                      # bf16 activation scratch
              + R * OW * 4                       # f32 output
              + (S.size + ST.size + b2_row.size + mask.size
                 + gamma_c.size + beta_c.size) * 4)
  try:
    vmem_cap = int(pltpu.get_tpu_info().vmem_capacity_bytes)
  except Exception:
    vmem_cap = 64 * 2 ** 20                      # conservative (v7x per-core)
  vmem_limit = int(min(2 * resident + (8 << 20), int(vmem_cap * 0.45)))

  vmem = pl.BlockSpec(memory_space=pltpu.MemorySpace.VMEM)
  smem = pl.BlockSpec(memory_space=pltpu.MemorySpace.SMEM)
  out2d = pl.pallas_call(
      partial(_generator_block_kernel, Rp=Rp, OW=OW, Cout=Cout,
              count=float(N * H * W), eps=float(eps)),
      out_shape=jax.ShapeDtypeStruct((R, OW), jnp.float32),
      in_specs=[vmem] * 9 + [smem],
      out_specs=vmem,
      scratch_shapes=[pltpu.VMEM((Rp, OW), jnp.bfloat16)],
      compiler_params=pltpu.CompilerParams(vmem_limit_bytes=vmem_limit),
  )(x2d, wf1, wf2, gamma_c, beta_c, S, ST, b2_row, mask, alpha1)

  # Gather per-image interior rows (padded row n*Hp+1+h lives at out2d row n*Hp+h);
  # pure host-side layout plumbing.
  rows = (np.arange(N)[:, None] * Hp + np.arange(H)[None, :]).reshape(-1)
  out = out2d[jnp.asarray(rows)].reshape(N, H, W, Cout)
  return jnp.transpose(out, (0, 3, 1, 2))                            # back to NCHW


def reference(x, w1, b1, gamma, beta, alpha, w2, b2, eps=1e-5):
  """Pure-JAX f32 reference matching the PyTorch forward (BatchNorm in training mode)."""
  dn = ('NCHW', 'HWIO', 'NCHW')
  y1 = lax.conv_general_dilated(x, w1, (1, 1), 'SAME', dimension_numbers=dn,
                                precision=lax.Precision.HIGHEST)
  y1 = y1 + b1[None, :, None, None]
  mean = y1.mean(axis=(0, 2, 3), keepdims=True)
  var = y1.var(axis=(0, 2, 3), keepdims=True)                        # biased, as PyTorch BN
  y2 = (gamma[None, :, None, None] * (y1 - mean) / jnp.sqrt(var + eps)
        + beta[None, :, None, None])
  y3 = jnp.where(y2 >= 0, y2, alpha * y2)
  y4 = lax.conv_general_dilated(y3, w2, (1, 1), 'SAME', dimension_numbers=dn,
                                precision=lax.Precision.HIGHEST)
  return y4 + b2[None, :, None, None]


if __name__ == "__main__":
  key = jax.random.PRNGKey(0)
  N, Cin, Cout, H, Wd = 2, 4, 8, 16, 16
  ks = jax.random.split(key, 7)

  x = jax.random.normal(ks[0], (N, Cin, H, Wd), jnp.float32)
  # deterministic synthetic parameters (shapes from the module __init__)
  w1 = 0.2 * jax.random.normal(ks[1], (3, 3, Cin, Cout), jnp.float32)   # conv1 (HWIO)
  b1 = 0.1 * jax.random.normal(ks[2], (Cout,), jnp.float32)
  gamma = 1.0 + 0.1 * jax.random.normal(ks[3], (Cout,), jnp.float32)    # bn1 weight
  beta = 0.1 * jax.random.normal(ks[4], (Cout,), jnp.float32)           # bn1 bias
  alpha = jnp.float32(0.25)                                             # PReLU default init
  w2 = 0.2 * jax.random.normal(ks[5], (3, 3, Cout, Cout), jnp.float32)  # conv2 (HWIO)
  b2 = 0.1 * jax.random.normal(ks[6], (Cout,), jnp.float32)

  out = generator_block(x, w1, b1, gamma, beta, alpha, w2, b2)
  out = jax.block_until_ready(out)
  assert out.shape == (N, Cout, H, Wd)

  ref = reference(x, w1, b1, gamma, beta, alpha, w2, b2)
  err = float(jnp.max(jnp.abs(out - ref)))
  # bf16 MXU operands / bf16 conv2-input activation with f32 accumulation vs. the
  # full-f32 reference: expect ~1e-2-level worst-case abs error at these magnitudes.
  if not bool(jnp.allclose(out, ref, atol=2e-2, rtol=2e-2)):
    raise AssertionError(f"kernel/reference mismatch, max abs err = {err}")
  print("KERNEL_OK")
</pallas_src>

<mosaic_0001>
module attributes {stable_mosaic.version = 11 : i64} {
  func.func @_generator_block_kernel(%arg0: memref<40x64xbf16, #tpu.memory_space<vmem>>, %arg1: memref<64x384xbf16, #tpu.memory_space<vmem>>, %arg2: memref<128x384xbf16, #tpu.memory_space<vmem>>, %arg3: memref<1x8xf32, #tpu.memory_space<vmem>>, %arg4: memref<1x8xf32, #tpu.memory_space<vmem>>, %arg5: memref<128x8xf32, #tpu.memory_space<vmem>>, %arg6: memref<8x128xf32, #tpu.memory_space<vmem>>, %arg7: memref<1x128xf32, #tpu.memory_space<vmem>>, %arg8: memref<38x1xf32, #tpu.memory_space<vmem>>, %arg9: memref<1xf32, #tpu.memory_space<smem>>, %arg10: memref<38x128xf32, #tpu.memory_space<vmem>>, %arg11: memref<40x128xbf16, #tpu.memory_space<vmem>>) attributes {dimension_semantics = [], scalar_prefetch = 0 : i64, scratch_operands = 1 : i64, tpu.core_type = #tpu.core_type<tc>} {
    %c0 = arith.constant 0 : index
    %c0_0 = arith.constant 0 : index
    %0 = vector.load %arg0[%c0, %c0_0] : memref<40x64xbf16, #tpu.memory_space<vmem>>, vector<40x64xbf16>
    %c0_1 = arith.constant 0 : index
    %c0_2 = arith.constant 0 : index
    %1 = vector.load %arg1[%c0_1, %c0_2] : memref<64x384xbf16, #tpu.memory_space<vmem>>, vector<64x384xbf16>
    %cst = arith.constant dense<0.000000e+00> : vector<40x384xf32>
    %2 = tpu.matmul %0, %1, %cst {dimension_numbers = #tpu.dot_dimension_numbers<[1], [0], [0], [1], [0, 0, 1, 1], [], []>} : vector<40x64xbf16>, vector<64x384xbf16>, vector<40x384xf32> -> vector<40x384xf32>
    %3 = vector.extract_strided_slice %2 {offsets = [0, 0], sizes = [40, 128], strides = [1, 1]} : vector<40x384xf32> to vector<40x128xf32>
    %4 = vector.extract_strided_slice %2 {offsets = [0, 128], sizes = [40, 128], strides = [1, 1]} : vector<40x384xf32> to vector<40x128xf32>
    %5 = vector.extract_strided_slice %2 {offsets = [0, 256], sizes = [40, 128], strides = [1, 1]} : vector<40x384xf32> to vector<40x128xf32>
    %c0_3 = arith.constant 0 : index
    %c0_4 = arith.constant 0 : index
    %6 = vector.load %arg8[%c0_3, %c0_4] : memref<38x1xf32, #tpu.memory_space<vmem>>, vector<38x1xf32>
    %7 = vector.extract_strided_slice %3 {offsets = [0, 0], sizes = [38, 128], strides = [1, 1]} : vector<40x128xf32> to vector<38x128xf32>
    %8 = vector.extract_strided_slice %4 {offsets = [1, 0], sizes = [38, 128], strides = [1, 1]} : vector<40x128xf32> to vector<38x128xf32>
    %9 = arith.addf %7, %8 : vector<38x128xf32>
    %10 = vector.extract_strided_slice %5 {offsets = [2, 0], sizes = [38, 128], strides = [1, 1]} : vector<40x128xf32> to vector<38x128xf32>
    %11 = arith.addf %9, %10 : vector<38x128xf32>
    %12 = vector.broadcast %6 : vector<38x1xf32> to vector<38x128xf32>
    %13 = arith.mulf %11, %12 : vector<38x128xf32>
    %14 = tpu.iota {dimensions = array<i32: 0>} : vector<2x128xi32>
    %c0_i32 = arith.constant 0 : i32
    %15 = vector.broadcast %c0_i32 : i32 to vector<2x128xi32>
    %16 = arith.cmpi eq, %14, %15 : vector<2x128xi32>
    %cst_5 = arith.constant dense<0.000000e+00> : vector<128xf32>
    %17 = vector.multi_reduction <add>, %13, %cst_5 [0] : vector<38x128xf32> to vector<128xf32>
    %18 = vector.shape_cast %17 : vector<128xf32> to vector<1x128xf32>
    %19 = arith.mulf %13, %13 : vector<38x128xf32>
    %cst_6 = arith.constant dense<0.000000e+00> : vector<128xf32>
    %20 = vector.multi_reduction <add>, %19, %cst_6 [0] : vector<38x128xf32> to vector<128xf32>
    %21 = vector.shape_cast %20 : vector<128xf32> to vector<1x128xf32>
    %22 = vector.shape_cast %18 : vector<1x128xf32> to vector<1x128xf32>
    %23 = vector.broadcast %22 : vector<1x128xf32> to vector<2x128xf32>
    %24 = vector.shape_cast %21 : vector<1x128xf32> to vector<1x128xf32>
    %25 = vector.broadcast %24 : vector<1x128xf32> to vector<2x128xf32>
    %26 = arith.select %16, %23, %25 : vector<2x128xi1>, vector<2x128xf32>
    %c0_7 = arith.constant 0 : index
    %c0_8 = arith.constant 0 : index
    %27 = vector.load %arg5[%c0_7, %c0_8] : memref<128x8xf32, #tpu.memory_space<vmem>>, vector<128x8xf32>
    %cst_9 = arith.constant dense<0.000000e+00> : vector<2x8xf32>
    %28 = tpu.matmul %26, %27, %cst_9 {dimension_numbers = #tpu.dot_dimension_numbers<[1], [0], [0], [1], [0, 0, 1, 1], [], []>} : vector<2x128xf32>, vector<128x8xf32>, vector<2x8xf32> -> vector<2x8xf32>
    %29 = vector.extract_strided_slice %28 {offsets = [0, 0], sizes = [1, 8], strides = [1, 1]} : vector<2x8xf32> to vector<1x8xf32>
    %cst_10 = arith.constant 0.001953125 : f32
    %30 = vector.broadcast %cst_10 : f32 to vector<1x8xf32>
    %31 = arith.mulf %29, %30 : vector<1x8xf32>
    %32 = vector.extract_strided_slice %28 {offsets = [1, 0], sizes = [1, 8], strides = [1, 1]} : vector<2x8xf32> to vector<1x8xf32>
    %cst_11 = arith.constant 0.001953125 : f32
    %33 = vector.broadcast %cst_11 : f32 to vector<1x8xf32>
    %34 = arith.mulf %32, %33 : vector<1x8xf32>
    %35 = arith.mulf %31, %31 : vector<1x8xf32>
    %36 = arith.subf %34, %35 : vector<1x8xf32>
    %cst_12 = arith.constant 0.000000e+00 : f32
    %37 = vector.broadcast %cst_12 : f32 to vector<1x8xf32>
    %38 = arith.maximumf %36, %37 : vector<1x8xf32>
    %cst_13 = arith.constant 9.99999974E-6 : f32
    %39 = vector.broadcast %cst_13 : f32 to vector<1x8xf32>
    %40 = arith.addf %38, %39 : vector<1x8xf32>
    %41 = math.rsqrt %40 : vector<1x8xf32>
    %c0_14 = arith.constant 0 : index
    %c0_15 = arith.constant 0 : index
    %42 = vector.load %arg3[%c0_14, %c0_15] : memref<1x8xf32, #tpu.memory_space<vmem>>, vector<1x8xf32>
    %43 = arith.mulf %42, %41 : vector<1x8xf32>
    %c0_16 = arith.constant 0 : index
    %c0_17 = arith.constant 0 : index
    %44 = vector.load %arg4[%c0_16, %c0_17] : memref<1x8xf32, #tpu.memory_space<vmem>>, vector<1x8xf32>
    %45 = arith.mulf %43, %31 : vector<1x8xf32>
    %46 = arith.subf %44, %45 : vector<1x8xf32>
    %47 = tpu.iota {dimensions = array<i32: 0>} : vector<2x8xi32>
    %c0_i32_18 = arith.constant 0 : i32
    %48 = vector.broadcast %c0_i32_18 : i32 to vector<2x8xi32>
    %49 = arith.cmpi eq, %47, %48 : vector<2x8xi32>
    %50 = vector.shape_cast %43 : vector<1x8xf32> to vector<1x8xf32>
    %51 = vector.broadcast %50 : vector<1x8xf32> to vector<2x8xf32>
    %52 = vector.shape_cast %46 : vector<1x8xf32> to vector<1x8xf32>
    %53 = vector.broadcast %52 : vector<1x8xf32> to vector<2x8xf32>
    %54 = arith.select %49, %51, %53 : vector<2x8xi1>, vector<2x8xf32>
    %c0_19 = arith.constant 0 : index
    %c0_20 = arith.constant 0 : index
    %55 = vector.load %arg6[%c0_19, %c0_20] : memref<8x128xf32, #tpu.memory_space<vmem>>, vector<8x128xf32>
    %cst_21 = arith.constant dense<0.000000e+00> : vector<2x128xf32>
    %56 = tpu.matmul %54, %55, %cst_21 {dimension_numbers = #tpu.dot_dimension_numbers<[1], [0], [0], [1], [0, 0, 1, 1], [], []>} : vector<2x8xf32>, vector<8x128xf32>, vector<2x128xf32> -> vector<2x128xf32>
    %57 = vector.extract_strided_slice %56 {offsets = [0, 0], sizes = [1, 128], strides = [1, 1]} : vector<2x128xf32> to vector<1x128xf32>
    %58 = vector.extract_strided_slice %56 {offsets = [1, 0], sizes = [1, 128], strides = [1, 1]} : vector<2x128xf32> to vector<1x128xf32>
    %c0_22 = arith.constant 0 : index
    %59 = memref.load %arg9[%c0_22] : memref<1xf32, #tpu.memory_space<smem>>
    %60 = vector.broadcast %57 : vector<1x128xf32> to vector<38x128xf32>
    %61 = arith.mulf %13, %60 : vector<38x128xf32>
    %62 = vector.broadcast %58 : vector<1x128xf32> to vector<38x128xf32>
    %63 = arith.addf %61, %62 : vector<38x128xf32>
    %cst_23 = arith.constant 0.000000e+00 : f32
    %64 = vector.broadcast %cst_23 : f32 to vector<38x128xf32>
    %65 = arith.cmpf oge, %63, %64 : vector<38x128xf32>
    %66 = vector.broadcast %59 : f32 to vector<38x128xf32>
    %67 = arith.mulf %66, %63 : vector<38x128xf32>
    %68 = arith.select %65, %63, %67 : vector<38x128xi1>, vector<38x128xf32>
    %69 = vector.broadcast %6 : vector<38x1xf32> to vector<38x128xf32>
    %70 = arith.mulf %68, %69 : vector<38x128xf32>
    %cst_24 = arith.constant 0.000000e+00 : bf16
    %71 = vector.broadcast %cst_24 : bf16 to vector<40x128xbf16>
    %c0_25 = arith.constant 0 : index
    %c0_26 = arith.constant 0 : index
    %72 = vector.load %arg11[%c0_25, %c0_26] : memref<40x128xbf16, #tpu.memory_space<vmem>>, vector<40x128xbf16>
    tpu.vector_store %arg11[%c0_25, %c0_26], %71 {strides = array<i32>} : memref<40x128xbf16, #tpu.memory_space<vmem>>, vector<40x128xbf16>,
    %73 = arith.truncf %70 : vector<38x128xf32> to vector<38x128xbf16>
    %c1 = arith.constant 1 : index
    %c0_27 = arith.constant 0 : index
    %74 = vector.load %arg11[%c1, %c0_27] : memref<40x128xbf16, #tpu.memory_space<vmem>>, vector<38x128xbf16>
    tpu.vector_store %arg11[%c1, %c0_27], %73 {strides = array<i32>} : memref<40x128xbf16, #tpu.memory_space<vmem>>, vector<38x128xbf16>,
    %c0_28 = arith.constant 0 : index
    %c0_29 = arith.constant 0 : index
    %75 = vector.load %arg11[%c0_28, %c0_29] : memref<40x128xbf16, #tpu.memory_space<vmem>>, vector<40x128xbf16>
    %c0_30 = arith.constant 0 : index
    %c0_31 = arith.constant 0 : index
    %76 = vector.load %arg2[%c0_30, %c0_31] : memref<128x384xbf16, #tpu.memory_space<vmem>>, vector<128x384xbf16>
    %cst_32 = arith.constant dense<0.000000e+00> : vector<40x384xf32>
    %77 = tpu.matmul %75, %76, %cst_32 {dimension_numbers = #tpu.dot_dimension_numbers<[1], [0], [0], [1], [0, 0, 1, 1], [], []>} : vector<40x128xbf16>, vector<128x384xbf16>, vector<40x384xf32> -> vector<40x384xf32>
    %78 = vector.extract_strided_slice %77 {offsets = [0, 0], sizes = [40, 128], strides = [1, 1]} : vector<40x384xf32> to vector<40x128xf32>
    %79 = vector.extract_strided_slice %77 {offsets = [0, 128], sizes = [40, 128], strides = [1, 1]} : vector<40x384xf32> to vector<40x128xf32>
    %80 = vector.extract_strided_slice %77 {offsets = [0, 256], sizes = [40, 128], strides = [1, 1]} : vector<40x384xf32> to vector<40x128xf32>
    %81 = vector.extract_strided_slice %78 {offsets = [0, 0], sizes = [38, 128], strides = [1, 1]} : vector<40x128xf32> to vector<38x128xf32>
    %82 = vector.extract_strided_slice %79 {offsets = [1, 0], sizes = [38, 128], strides = [1, 1]} : vector<40x128xf32> to vector<38x128xf32>
    %83 = arith.addf %81, %82 : vector<38x128xf32>
    %84 = vector.extract_strided_slice %80 {offsets = [2, 0], sizes = [38, 128], strides = [1, 1]} : vector<40x128xf32> to vector<38x128xf32>
    %85 = arith.addf %83, %84 : vector<38x128xf32>
    %c0_33 = arith.constant 0 : index
    %c0_34 = arith.constant 0 : index
    %86 = vector.load %arg7[%c0_33, %c0_34] : memref<1x128xf32, #tpu.memory_space<vmem>>, vector<1x128xf32>
    %87 = vector.broadcast %86 : vector<1x128xf32> to vector<38x128xf32>
    %88 = arith.addf %85, %87 : vector<38x128xf32>
    %c0_35 = arith.constant 0 : index
    %c0_36 = arith.constant 0 : index
    %89 = vector.load %arg10[%c0_35, %c0_36] : memref<38x128xf32, #tpu.memory_space<vmem>>, vector<38x128xf32>
    tpu.vector_store %arg10[%c0_35, %c0_36], %88 {strides = array<i32>} : memref<38x128xf32, #tpu.memory_space<vmem>>, vector<38x128xf32>,
    return
  }
}

</mosaic_0001>

<llo_original>
// kernel: tile.19
$region0: #{tile.19}
  %s0 = inlined_call_operand.vmem [shape: f32[16,8,8], index: 0, kind: input, shape index: {}]
  %s1 = inlined_call_operand.vmem [shape: f32[128,8], index: 1, kind: output, shape index: {}]
  %s2 = smov 3
  %v3 = vld [vmem:[%s0] ss:$16 sm:%s2]
  %s4 = smov 12
  %v5 = vld [vmem:[%s0] ss:$16 sm:%s4]
  %vm6 = vcmask 1043458
  %v7 = vsel %vm6, %v5, %v3
  %s8 = smov 48
  %v9 = vld [vmem:[%s0] ss:$16 sm:%s8]
  %vm10 = vcmask 1045508
  %v11 = vsel %vm10, %v9, %v7
  %s12 = smov 192
  %v13 = vld [vmem:[%s0] ss:$16 sm:%s12]
  %vm14 = vcmask 1047558
  %v15 = vsel %vm14, %v13, %v11
  %vm16 = vcmask 64512
  %17 = vst.msk [vmem:[%s1] sm:$0xff] %vm16, %v15
  %s18 = scalar_lea.vmem %s0, 15
  %s19 = smov 3
  %v20 = vld [vmem:[%s18] ss:$16 sm:%s19]
  %s21 = scalar_lea.vmem %s0, 15
  %s22 = smov 12
  %v23 = vld [vmem:[%s21] ss:$16 sm:%s22]
  %vm24 = vcmask 1043458
  %v25 = vsel %vm24, %v23, %v20
  %s26 = scalar_lea.vmem %s0, 15
  %s27 = smov 48
  %v28 = vld [vmem:[%s26] ss:$16 sm:%s27]
  %vm29 = vcmask 1045508
  %v30 = vsel %vm29, %v28, %v25
  %s31 = scalar_lea.vmem %s0, 15
  %s32 = smov 192
  %v33 = vld [vmem:[%s31] ss:$16 sm:%s32]
  %vm34 = vcmask 1047558
  %v35 = vsel %vm34, %v33, %v30
  %36 = vrot.lane.b32.xlu0 %v35, 120
  %v37 = vpop.permute.xlu0 %36
  %vm38 = vcmask 1048512
  %39 = vst.msk [vmem:[%s1] sm:$0xff] %vm38, %v37
  %s40 = scalar_lea.vmem %s0, 14
  %s41 = smov 3
  %v42 = vld [vmem:[%s40] ss:$16 sm:%s41]
  %s43 = scalar_lea.vmem %s0, 14
  %s44 = smov 12
  %v45 = vld [vmem:[%s43] ss:$16 sm:%s44]
  %vm46 = vcmask 1043458
  %v47 = vsel %vm46, %v45, %v42
  %s48 = scalar_lea.vmem %s0, 14
  %s49 = smov 48
  %v50 = vld [vmem:[%s48] ss:$16 sm:%s49]
  %vm51 = vcmask 1045508
  %v52 = vsel %vm51, %v50, %v47
  %s53 = scalar_lea.vmem %s0, 14
  %s54 = smov 192
  %v55 = vld [vmem:[%s53] ss:$16 sm:%s54]
  %vm56 = vcmask 1047558
  %v57 = vsel %vm56, %v55, %v52
  %58 = vrot.lane.b32.xlu0 %v57, 112
  %v59 = vpop.permute.xlu0 %58
  %vm60 = vcmask 982912
  %61 = vst.msk [vmem:[%s1] sm:$0xff] %vm60, %v59
  %s62 = scalar_lea.vmem %s0, 13
  %s63 = smov 3
  %v64 = vld [vmem:[%s62] ss:$16 sm:%s63]
  %s65 = scalar_lea.vmem %s0, 13
  %s66 = smov 12
  %v67 = vld [vmem:[%s65] ss:$16 sm:%s66]
  %vm68 = vcmask 1043458
  %v69 = vsel %vm68, %v67, %v64
  %s70 = scalar_lea.vmem %s0, 13
  %s71 = smov 48
  %v72 = vld [vmem:[%s70] ss:$16 sm:%s71]
  %vm73 = vcmask 1045508
  %v74 = vsel %vm73, %v72, %v69
  %s75 = scalar_lea.vmem %s0, 13
  %s76 = smov 192
  %v77 = vld [vmem:[%s75] ss:$16 sm:%s76]
  %vm78 = vcmask 1047558
  %v79 = vsel %vm78, %v77, %v74
  %80 = vrot.lane.b32.xlu0 %v79, 104
  %v81 = vpop.permute.xlu0 %80
  %vm82 = vcmask 917312
  %83 = vst.msk [vmem:[%s1] sm:$0xff] %vm82, %v81
  %s84 = scalar_lea.vmem %s0, 12
  %s85 = smov 3
  %v86 = vld [vmem:[%s84] ss:$16 sm:%s85]
  %s87 = scalar_lea.vmem %s0, 12
  %s88 = smov 12
  %v89 = vld [vmem:[%s87] ss:$16 sm:%s88]
  %vm90 = vcmask 1043458
  %v91 = vsel %vm90, %v89, %v86
  %s92 = scalar_lea.vmem %s0, 12
  %s93 = smov 48
  %v94 = vld [vmem:[%s92] ss:$16 sm:%s93]
  %vm95 = vcmask 1045508
  %v96 = vsel %vm95, %v94, %v91
  %s97 = scalar_lea.vmem %s0, 12
  %s98 = smov 192
  %v99 = vld [vmem:[%s97] ss:$16 sm:%s98]
  %vm100 = vcmask 1047558
  %v101 = vsel %vm100, %v99, %v96
  %102 = vrot.lane.b32.xlu0 %v101, 96
  %v103 = vpop.permute.xlu0 %102
  %vm104 = vcmask 851712
  %105 = vst.msk [vmem:[%s1] sm:$0xff] %vm104, %v103
  %s106 = scalar_lea.vmem %s0, 11
  %s107 = smov 3
  %v108 = vld [vmem:[%s106] ss:$16 sm:%s107]
  %s109 = scalar_lea.vmem %s0, 11
  %s110 = smov 12
  %v111 = vld [vmem:[%s109] ss:$16 sm:%s110]
  %vm112 = vcmask 1043458
  %v113 = vsel %vm112, %v111, %v108
  %s114 = scalar_lea.vmem %s0, 11
  %s115 = smov 48
  %v116 = vld [vmem:[%s114] ss:$16 sm:%s115]
  %vm117 = vcmask 1045508
  %v118 = vsel %vm117, %v116, %v113
  %s119 = scalar_lea.vmem %s0, 11
  %s120 = smov 192
  %v121 = vld [vmem:[%s119] ss:$16 sm:%s120]
  %vm122 = vcmask 1047558
  %v123 = vsel %vm122, %v121, %v118
  %124 = vrot.lane.b32.xlu0 %v123, 88
  %v125 = vpop.permute.xlu0 %124
  %vm126 = vcmask 786112
  %127 = vst.msk [vmem:[%s1] sm:$0xff] %vm126, %v125
  %s128 = scalar_lea.vmem %s0, 10
  %s129 = smov 3
  %v130 = vld [vmem:[%s128] ss:$16 sm:%s129]
  %s131 = scalar_lea.vmem %s0, 10
  %s132 = smov 12
  %v133 = vld [vmem:[%s131] ss:$16 sm:%s132]
  %vm134 = vcmask 1043458
  %v135 = vsel %vm134, %v133, %v130
  %s136 = scalar_lea.vmem %s0, 10
  %s137 = smov 48
  %v138 = vld [vmem:[%s136] ss:$16 sm:%s137]
  %vm139 = vcmask 1045508
  %v140 = vsel %vm139, %v138, %v135
  %s141 = scalar_lea.vmem %s0, 10
  %s142 = smov 192
  %v143 = vld [vmem:[%s141] ss:$16 sm:%s142]
  %vm144 = vcmask 1047558
  %v145 = vsel %vm144, %v143, %v140
  %146 = vrot.lane.b32.xlu0 %v145, 80
  %v147 = vpop.permute.xlu0 %146
  %vm148 = vcmask 720512
  %149 = vst.msk [vmem:[%s1] sm:$0xff] %vm148, %v147
  %s150 = scalar_lea.vmem %s0, 9
  %s151 = smov 3
  %v152 = vld [vmem:[%s150] ss:$16 sm:%s151]
  %s153 = scalar_lea.vmem %s0, 9
  %s154 = smov 12
  %v155 = vld [vmem:[%s153] ss:$16 sm:%s154]
  %vm156 = vcmask 1043458
  %v157 = vsel %vm156, %v155, %v152
  %s158 = scalar_lea.vmem %s0, 9
  %s159 = smov 48
  %v160 = vld [vmem:[%s158] ss:$16 sm:%s159]
  %vm161 = vcmask 1045508
  %v162 = vsel %vm161, %v160, %v157
  %s163 = scalar_lea.vmem %s0, 9
  %s164 = smov 192
  %v165 = vld [vmem:[%s163] ss:$16 sm:%s164]
  %vm166 = vcmask 1047558
  %v167 = vsel %vm166, %v165, %v162
  %168 = vrot.lane.b32.xlu0 %v167, 72
  %v169 = vpop.permute.xlu0 %168
  %vm170 = vcmask 654912
  %171 = vst.msk [vmem:[%s1] sm:$0xff] %vm170, %v169
  %s172 = scalar_lea.vmem %s0, 8
  %s173 = smov 3
  %v174 = vld [vmem:[%s172] ss:$16 sm:%s173]
  %s175 = scalar_lea.vmem %s0, 8
  %s176 = smov 12
  %v177 = vld [vmem:[%s175] ss:$16 sm:%s176]
  %vm178 = vcmask 1043458
  %v179 = vsel %vm178, %v177, %v174
  %s180 = scalar_lea.vmem %s0, 8
  %s181 = smov 48
  %v182 = vld [vmem:[%s180] ss:$16 sm:%s181]
  %vm183 = vcmask 1045508
  %v184 = vsel %vm183, %v182, %v179
  %s185 = scalar_lea.vmem %s0, 8
  %s186 = smov 192
  %v187 = vld [vmem:[%s185] ss:$16 sm:%s186]
  %vm188 = vcmask 1047558
  %v189 = vsel %vm188, %v187, %v184
  %190 = vrot.lane.b32.xlu0 %v189, 64
  %v191 = vpop.permute.xlu0 %190
  %vm192 = vcmask 589312
  %193 = vst.msk [vmem:[%s1] sm:$0xff] %vm192, %v191
  %s194 = scalar_lea.vmem %s0, 7
  %s195 = smov 3
  %v196 = vld [vmem:[%s194] ss:$16 sm:%s195]
  %s197 = scalar_lea.vmem %s0, 7
  %s198 = smov 12
  %v199 = vld [vmem:[%s197] ss:$16 sm:%s198]
  %vm200 = vcmask 1043458
  %v201 = vsel %vm200, %v199, %v196
  %s202 = scalar_lea.vmem %s0, 7
  %s203 = smov 48
  %v204 = vld [vmem:[%s202] ss:$16 sm:%s203]
  %vm205 = vcmask 1045508
  %v206 = vsel %vm205, %v204, %v201
  %s207 = scalar_lea.vmem %s0, 7
  %s208 = smov 192
  %v209 = vld [vmem:[%s207] ss:$16 sm:%s208]
  %vm210 = vcmask 1047558
  %v211 = vsel %vm210, %v209, %v206
  %212 = vrot.lane.b32.xlu0 %v211, 56
  %v213 = vpop.permute.xlu0 %212
  %vm214 = vcmask 523712
  %215 = vst.msk [vmem:[%s1] sm:$0xff] %vm214, %v213
  %s216 = scalar_lea.vmem %s0, 6
  %s217 = smov 3
  %v218 = vld [vmem:[%s216] ss:$16 sm:%s217]
  %s219 = scalar_lea.vmem %s0, 6
  %s220 = smov 12
  %v221 = vld [vmem:[%s219] ss:$16 sm:%s220]
  %vm222 = vcmask 1043458
  %v223 = vsel %vm222, %v221, %v218
  %s224 = scalar_lea.vmem %s0, 6
  %s225 = smov 48
  %v226 = vld [vmem:[%s224] ss:$16 sm:%s225]
  %vm227 = vcmask 1045508
  %v228 = vsel %vm227, %v226, %v223
  %s229 = scalar_lea.vmem %s0, 6
  %s230 = smov 192
  %v231 = vld [vmem:[%s229] ss:$16 sm:%s230]
  %vm232 = vcmask 1047558
  %v233 = vsel %vm232, %v231, %v228
  %234 = vrot.lane.b32.xlu0 %v233, 48
  %v235 = vpop.permute.xlu0 %234
  %vm236 = vcmask 458112
  %237 = vst.msk [vmem:[%s1] sm:$0xff] %vm236, %v235
  %s238 = scalar_lea.vmem %s0, 5
  %s239 = smov 3
  %v240 = vld [vmem:[%s238] ss:$16 sm:%s239]
  %s241 = scalar_lea.vmem %s0, 5
  %s242 = smov 12
  %v243 = vld [vmem:[%s241] ss:$16 sm:%s242]
  %vm244 = vcmask 1043458
  %v245 = vsel %vm244, %v243, %v240
  %s246 = scalar_lea.vmem %s0, 5
  %s247 = smov 48
  %v248 = vld [vmem:[%s246] ss:$16 sm:%s247]
  %vm249 = vcmask 1045508
  %v250 = vsel %vm249, %v248, %v245
  %s251 = scalar_lea.vmem %s0, 5
  %s252 = smov 192
  %v253 = vld [vmem:[%s251] ss:$16 sm:%s252]
  %vm254 = vcmask 1047558
  %v255 = vsel %vm254, %v253, %v250
  %256 = vrot.lane.b32.xlu0 %v255, 40
  %v257 = vpop.permute.xlu0 %256
  %vm258 = vcmask 392512
  %259 = vst.msk [vmem:[%s1] sm:$0xff] %vm258, %v257
  %s260 = scalar_lea.vmem %s0, 4
  %s261 = smov 3
  %v262 = vld [vmem:[%s260] ss:$16 sm:%s261]
  %s263 = scalar_lea.vmem %s0, 4
  %s264 = smov 12
  %v265 = vld [vmem:[%s263] ss:$16 sm:%s264]
  %vm266 = vcmask 1043458
  %v267 = vsel %vm266, %v265, %v262
  %s268 = scalar_lea.vmem %s0, 4
  %s269 = smov 48
  %v270 = vld [vmem:[%s268] ss:$16 sm:%s269]
  %vm271 = vcmask 1045508
  %v272 = vsel %vm271, %v270, %v267
  %s273 = scalar_lea.vmem %s0, 4
  %s274 = smov 192
  %v275 = vld [vmem:[%s273] ss:$16 sm:%s274]
  %vm276 = vcmask 1047558
  %v277 = vsel %vm276, %v275, %v272
  %278 = vrot.lane.b32.xlu0 %v277, 32
  %v279 = vpop.permute.xlu0 %278
  %vm280 = vcmask 326912
  %281 = vst.msk [vmem:[%s1] sm:$0xff] %vm280, %v279
  %s282 = scalar_lea.vmem %s0, 3
  %s283 = smov 3
  %v284 = vld [vmem:[%s282] ss:$16 sm:%s283]
  %s285 = scalar_lea.vmem %s0, 3
  %s286 = smov 12
  %v287 = vld [vmem:[%s285] ss:$16 sm:%s286]
  %vm288 = vcmask 1043458
  %v289 = vsel %vm288, %v287, %v284
  %s290 = scalar_lea.vmem %s0, 3
  %s291 = smov 48
  %v292 = vld [vmem:[%s290] ss:$16 sm:%s291]
  %vm293 = vcmask 1045508
  %v294 = vsel %vm293, %v292, %v289
  %s295 = scalar_lea.vmem %s0, 3
  %s296 = smov 192
  %v297 = vld [vmem:[%s295] ss:$16 sm:%s296]
  %vm298 = vcmask 1047558
  %v299 = vsel %vm298, %v297, %v294
  %300 = vrot.lane.b32.xlu0 %v299, 24
  %v301 = vpop.permute.xlu0 %300
  %vm302 = vcmask 261312
  %303 = vst.msk [vmem:[%s1] sm:$0xff] %vm302, %v301
  %s304 = scalar_lea.vmem %s0, 2
  %s305 = smov 3
  %v306 = vld [vmem:[%s304] ss:$16 sm:%s305]
  %s307 = scalar_lea.vmem %s0, 2
  %s308 = smov 12
  %v309 = vld [vmem:[%s307] ss:$16 sm:%s308]
  %vm310 = vcmask 1043458
  %v311 = vsel %vm310, %v309, %v306
  %s312 = scalar_lea.vmem %s0, 2
  %s313 = smov 48
  %v314 = vld [vmem:[%s312] ss:$16 sm:%s313]
  %vm315 = vcmask 1045508
  %v316 = vsel %vm315, %v314, %v311
  %s317 = scalar_lea.vmem %s0, 2
  %s318 = smov 192
  %v319 = vld [vmem:[%s317] ss:$16 sm:%s318]
  %vm320 = vcmask 1047558
  %v321 = vsel %vm320, %v319, %v316
  %322 = vrot.lane.b32.xlu0 %v321, 16
  %v323 = vpop.permute.xlu0 %322
  %vm324 = vcmask 195712
  %325 = vst.msk [vmem:[%s1] sm:$0xff] %vm324, %v323
  %s326 = scalar_lea.vmem %s0, 1
  %s327 = smov 3
  %v328 = vld [vmem:[%s326] ss:$16 sm:%s327]
  %s329 = scalar_lea.vmem %s0, 1
  %s330 = smov 12
  %v331 = vld [vmem:[%s329] ss:$16 sm:%s330]
  %vm332 = vcmask 1043458
  %v333 = vsel %vm332, %v331, %v328
  %s334 = scalar_lea.vmem %s0, 1
  %s335 = smov 48
  %v336 = vld [vmem:[%s334] ss:$16 sm:%s335]
  %vm337 = vcmask 1045508
  %v338 = vsel %vm337, %v336, %v333
  %s339 = scalar_lea.vmem %s0, 1
  %s340 = smov 192
  %v341 = vld [vmem:[%s339] ss:$16 sm:%s340]
  %vm342 = vcmask 1047558
  %v343 = vsel %vm342, %v341, %v338
  %344 = vrot.lane.b32.xlu0 %v343, 8
  %v345 = vpop.permute.xlu0 %344
  %vm346 = vcmask 130112
  %347 = vst.msk [vmem:[%s1] sm:$0xff] %vm346, %v345

// kernel: tile.13
$region0: #{tile.13}
  #allocation0 [shape = 's32[1]{0}', space=sflag, size = 0x4, scoped, tag = 'scoped memory for tile.13']
  %s0 = inlined_call_operand.vmem [shape: f32[8], index: 0, kind: input, shape index: {}]
  %s1 = inlined_call_operand.vmem [shape: f32[16,8], index: 1, kind: output, shape index: {}]
  // Predicated region
  $region2: #{tile.13} parent=0 // pred_check
    _
  $region3: #{tile.13} parent=0 // pred_check_branch
    %3 = sbr.rel (0) target = $region5
  $region4: #{tile.13} parent=0 // pred_region
    _
  $region5: #{tile.13} parent=0 // pred_fallthru
    _
  %v4 = vld [vmem:[%s0] ss:$0 sm:$0xff]
  %5 = vst [vmem:[%s1] sm:$0xff] %v4
  %s6 = scalar_lea.vmem %s1, 8
  %7 = vst [vmem:[%s6] sm:$0xff] %v4

// kernel: tile.14
$region0: #{tile.14}
  %s0 = inlined_call_operand.vmem [shape: f32[16,8], index: 0, kind: input, shape index: {}]
  %s1 = inlined_call_operand.vmem [shape: f32[1,128], index: 1, kind: output, shape index: {}]
  $region1: #{tile.14} parent=0
    #allocation0 [shape = 'u8[4096]{0}', space=vmem, size = 0x1000, scoped, tag = 'scoped mem for output reshape']
    %v2 = vld [vmem:[%s0] sm:$0x1]
    %vm3 = vcmask 64512
    %4 = vst.msk [vmem:[#allocation0] sm:$0x1] %vm3, %v2
    %s5 = scalar_lea.vmem %s0, 15
    %v6 = vld [vmem:[%s5] sm:$0x1]
    %7 = vrot.lane.b32.xlu0 %v6, 120
    %v8 = vpop.permute.xlu0 %7
    %vm9 = vcmask 1048512
    %10 = vst.msk [vmem:[#allocation0] sm:$0x1] %vm9, %v8
    %s11 = scalar_lea.vmem %s0, 14
    %v12 = vld [vmem:[%s11] sm:$0x1]
    %13 = vrot.lane.b32.xlu0 %v12, 112
    %v14 = vpop.permute.xlu0 %13
    %vm15 = vcmask 982912
    %16 = vst.msk [vmem:[#allocation0] sm:$0x1] %vm15, %v14
    %s17 = scalar_lea.vmem %s0, 13
    %v18 = vld [vmem:[%s17] sm:$0x1]
    %19 = vrot.lane.b32.xlu0 %v18, 104
    %v20 = vpop.permute.xlu0 %19
    %vm21 = vcmask 917312
    %22 = vst.msk [vmem:[#allocation0] sm:$0x1] %vm21, %v20
    %s23 = scalar_lea.vmem %s0, 12
    %v24 = vld [vmem:[%s23] sm:$0x1]
    %25 = vrot.lane.b32.xlu0 %v24, 96
    %v26 = vpop.permute.xlu0 %25
    %vm27 = vcmask 851712
    %28 = vst.msk [vmem:[#allocation0] sm:$0x1] %vm27, %v26
    %s29 = scalar_lea.vmem %s0, 11
    %v30 = vld [vmem:[%s29] sm:$0x1]
    %31 = vrot.lane.b32.xlu0 %v30, 88
    %v32 = vpop.permute.xlu0 %31
    %vm33 = vcmask 786112
    %34 = vst.msk [vmem:[#allocation0] sm:$0x1] %vm33, %v32
    %s35 = scalar_lea.vmem %s0, 10
    %v36 = vld [vmem:[%s35] sm:$0x1]
    %37 = vrot.lane.b32.xlu0 %v36, 80
    %v38 = vpop.permute.xlu0 %37
    %vm39 = vcmask 720512
    %40 = vst.msk [vmem:[#allocation0] sm:$0x1] %vm39, %v38
    %s41 = scalar_lea.vmem %s0, 9
    %v42 = vld [vmem:[%s41] sm:$0x1]
    %43 = vrot.lane.b32.xlu0 %v42, 72
    %v44 = vpop.permute.xlu0 %43
    %vm45 = vcmask 654912
    %46 = vst.msk [vmem:[#allocation0] sm:$0x1] %vm45, %v44
    %s47 = scalar_lea.vmem %s0, 8
    %v48 = vld [vmem:[%s47] sm:$0x1]
    %49 = vrot.lane.b32.xlu0 %v48, 64
    %v50 = vpop.permute.xlu0 %49
    %vm51 = vcmask 589312
    %52 = vst.msk [vmem:[#allocation0] sm:$0x1] %vm51, %v50
    %s53 = scalar_lea.vmem %s0, 7
    %v54 = vld [vmem:[%s53] sm:$0x1]
    %55 = vrot.lane.b32.xlu0 %v54, 56
    %v56 = vpop.permute.xlu0 %55
    %vm57 = vcmask 523712
    %58 = vst.msk [vmem:[#allocation0] sm:$0x1] %vm57, %v56
    %s59 = scalar_lea.vmem %s0, 6
    %v60 = vld [vmem:[%s59] sm:$0x1]
    %61 = vrot.lane.b32.xlu0 %v60, 48
    %v62 = vpop.permute.xlu0 %61
    %vm63 = vcmask 458112
    %64 = vst.msk [vmem:[#allocation0] sm:$0x1] %vm63, %v62
    %s65 = scalar_lea.vmem %s0, 5
    %v66 = vld [vmem:[%s65] sm:$0x1]
    %67 = vrot.lane.b32.xlu0 %v66, 40
    %v68 = vpop.permute.xlu0 %67
    %vm69 = vcmask 392512
    %70 = vst.msk [vmem:[#allocation0] sm:$0x1] %vm69, %v68
    %s71 = scalar_lea.vmem %s0, 4
    %v72 = vld [vmem:[%s71] sm:$0x1]
    %73 = vrot.lane.b32.xlu0 %v72, 32
    %v74 = vpop.permute.xlu0 %73
    %vm75 = vcmask 326912
    %76 = vst.msk [vmem:[#allocation0] sm:$0x1] %vm75, %v74
    %s77 = scalar_lea.vmem %s0, 3
    %v78 = vld [vmem:[%s77] sm:$0x1]
    %79 = vrot.lane.b32.xlu0 %v78, 24
    %v80 = vpop.permute.xlu0 %79
    %vm81 = vcmask 261312
    %82 = vst.msk [vmem:[#allocation0] sm:$0x1] %vm81, %v80
    %s83 = scalar_lea.vmem %s0, 2
    %v84 = vld [vmem:[%s83] sm:$0x1]
    %85 = vrot.lane.b32.xlu0 %v84, 16
    %v86 = vpop.permute.xlu0 %85
    %vm87 = vcmask 195712
    %88 = vst.msk [vmem:[#allocation0] sm:$0x1] %vm87, %v86
    %s89 = scalar_lea.vmem %s0, 1
    %v90 = vld [vmem:[%s89] sm:$0x1]
    %91 = vrot.lane.b32.xlu0 %v90, 8
    %v92 = vpop.permute.xlu0 %91
    %vm93 = vcmask 130112
    %94 = vst.msk [vmem:[#allocation0] sm:$0x1] %vm93, %v92
    %s96 = ssub.s32 2, 1
    %v97 = vld [vmem:[#allocation0] sm:%s96]
    %s99 = ssub.s32 2, 1
    %100 = vst [vmem:[%s1] sm:%s99] %v97

// kernel: generator_block.1
$region0: #{generator_block.1}
  #allocation0 [shape = 'u32[]', space=smem, size = 0x4, offset = 0x4, fixed_abs, tag = 'smem constant byte address 0x4 - core index']
  #allocation1 [shape = 'u32[72,128]{1,0:T(1,128)}', space=vmem, size = 0x9000, scoped, tag = 'internal scratch']
  #allocation2 [shape = 'bf16[40,128]{1,0:T(8,128)(2,1)}', space=vmem, size = 0x2800, scoped, tag = 'scratch operand']
  #allocation3 [shape = 'f32[1]{0:T(128)S(6)}', space=smem, size = 0x200, scoped, tag = 'scoped memory for generator_block.1']
  %s0 = inlined_call_operand.vmem [shape: bf16[40,64], index: 0, kind: input, shape index: {}]
  %s1 = inlined_call_operand.vmem [shape: bf16[64,384], index: 1, kind: input, shape index: {}]
  %s2 = inlined_call_operand.vmem [shape: bf16[128,384], index: 2, kind: input, shape index: {}]
  %s3 = inlined_call_operand.vmem [shape: f32[1,8], index: 3, kind: input, shape index: {}]
  %s4 = inlined_call_operand.vmem [shape: f32[1,8], index: 4, kind: input, shape index: {}]
  %s5 = inlined_call_operand.vmem [shape: f32[128,8], index: 5, kind: input, shape index: {}]
  %s6 = inlined_call_operand.vmem [shape: f32[8,128], index: 6, kind: input, shape index: {}]
  %s7 = inlined_call_operand.vmem [shape: f32[1,128], index: 7, kind: input, shape index: {}]
  %s8 = inlined_call_operand.vmem [shape: f32[38,1], index: 8, kind: input, shape index: {}]
  %s9 = inlined_call_operand.<no memory space> [shape: f32[1], index: 9, kind: input, shape index: {}]
  %s10 = inlined_call_operand.vmem [shape: f32[38,128], index: 10, kind: output, shape index: {}]
  %s11 = sld [smem:[#allocation0]]
  $region50: #{generator_block.1} parent=0
    _
  %s13 = ssub.s32 1, %s11
  %s14 = scalar_select 0, %s13, %s11
  %15 = sst [smem:[#allocation3]] %s9
  // Predicated region
  $region2: #{generator_block.1} parent=0 // pred_check
    _
  $region3: #{generator_block.1} parent=0 // pred_check_branch
    %17 = sbr.rel (0) target = $region5
  $region4: #{generator_block.1} parent=0 // pred_region
    _
  $region5: #{generator_block.1} parent=0 // pred_fallthru
    _
  // Predicated region
  $region6: #{generator_block.1} parent=0 // pred_check
    _
  $region7: #{generator_block.1} parent=0 // pred_check_branch
    %19 = sbr.rel (0) target = $region9
  $region8: #{generator_block.1} parent=0 // pred_region
    _
  $region9: #{generator_block.1} parent=0 // pred_fallthru
    _
  // Predicated region
  $region10: #{generator_block.1} parent=0 // pred_check
    _
  $region11: #{generator_block.1} parent=0 // pred_check_branch
    %21 = sbr.rel (0) target = $region13
  $region12: #{generator_block.1} parent=0 // pred_region
    _
  $region13: #{generator_block.1} parent=0 // pred_fallthru
    _
  // Predicated region
  $region14: #{generator_block.1} parent=0 // pred_check
    _
  $region15: #{generator_block.1} parent=0 // pred_check_branch
    %23 = sbr.rel (0) target = $region17
  $region16: #{generator_block.1} parent=0 // pred_region
    _
  $region17: #{generator_block.1} parent=0 // pred_fallthru
    _
  // Predicated region
  $region18: #{generator_block.1} parent=0 // pred_check
    _
  $region19: #{generator_block.1} parent=0 // pred_check_branch
    %25 = sbr.rel (0) target = $region21
  $region20: #{generator_block.1} parent=0 // pred_region
    _
  $region21: #{generator_block.1} parent=0 // pred_fallthru
    _
  // Predicated region
  $region22: #{generator_block.1} parent=0 // pred_check
    _
  $region23: #{generator_block.1} parent=0 // pred_check_branch
    %27 = sbr.rel (0) target = $region25
  $region24: #{generator_block.1} parent=0 // pred_region
    _
  $region25: #{generator_block.1} parent=0 // pred_fallthru
    _
  // Predicated region
  $region26: #{generator_block.1} parent=0 // pred_check
    _
  $region27: #{generator_block.1} parent=0 // pred_check_branch
    %29 = sbr.rel (0) target = $region29
  $region28: #{generator_block.1} parent=0 // pred_region
    _
  $region29: #{generator_block.1} parent=0 // pred_fallthru
    _
  // Predicated region
  $region30: #{generator_block.1} parent=0 // pred_check
    _
  $region31: #{generator_block.1} parent=0 // pred_check_branch
    %31 = sbr.rel (0) target = $region33
  $region32: #{generator_block.1} parent=0 // pred_region
    _
  $region33: #{generator_block.1} parent=0 // pred_fallthru
    _
  // Predicated region
  $region34: #{generator_block.1} parent=0 // pred_check
    _
  $region35: #{generator_block.1} parent=0 // pred_check_branch
    %33 = sbr.rel (0) target = $region37
  $region36: #{generator_block.1} parent=0 // pred_region
    _
  $region37: #{generator_block.1} parent=0 // pred_fallthru
    _
  // Predicated region
  $region38: #{generator_block.1} parent=0 // pred_check
    _
  $region39: #{generator_block.1} parent=0 // pred_check_branch
    %35 = sbr.rel (0) target = $region41
  $region40: #{generator_block.1} parent=0 // pred_region
    _
  $region41: #{generator_block.1} parent=0 // pred_fallthru
    _
  %v37 = vld [vmem:[%s0] sm:$0xf]
  %v38 = vld [vmem:[%s0 + $0x4] sm:$0xf]
  %v39 = vld [vmem:[%s0 + $0x8] sm:$0xf]
  %v40 = vld [vmem:[%s0 + $0xc] sm:$0xf]
  %v41 = vld [vmem:[%s0 + $0x10] sm:$0xf]
  %v42 = vld [vmem:[%s1] sm:$0xff]
  %v43 = vld [vmem:[%s1 + $0x8] sm:$0xf]
  %v44 = vld [vmem:[%s1 + $0xc] sm:$0xff]
  %v45 = vld [vmem:[%s1 + $0x14] sm:$0xf]
  %v46 = vld [vmem:[%s1 + $0x18] sm:$0xff]
  %v47 = vld [vmem:[%s1 + $0x20] sm:$0xf]
  %v48 = vld [vmem:[%s1 + $0x24] sm:$0xff]
  %v49 = vld [vmem:[%s1 + $0x2c] sm:$0xf]
  %v50 = vld [vmem:[%s1 + $0x30] sm:$0xff]
  %v51 = vld [vmem:[%s1 + $0x38] sm:$0xf]
  %v52 = vld [vmem:[%s1 + $0x3c] sm:$0xff]
  %v53 = vld [vmem:[%s1 + $0x44] sm:$0xf]
  %v54 = vld [vmem:[%s1 + $0x48] sm:$0xff]
  %v55 = vld [vmem:[%s1 + $0x50] sm:$0xf]
  %v56 = vld [vmem:[%s1 + $0x54] sm:$0xff]
  %v57 = vld [vmem:[%s1 + $0x5c] sm:$0xf]
  %v63 = vunpack.c.l.b16 %v37
  %v64 = vunpack.c.l.b16 %v38
  %v65 = vunpack.c.l.b16 %v39
  %v66 = vunpack.c.l.b16 %v40
  %v67 = vunpack.c.l.b16 %v41
  %v68 = vpack.c.b16 %v64, %v63
  %v69 = vpack.c.b16 %v66, %v65
  %v70 = vpack.c.b16 %v67, %v67
  %v87 = vunpack.c.l.b16 %v42
  %v88 = vunpack.c.h.b16 %v42
  %v89 = vunpack.c.l.b16 %v43
  %v90 = vunpack.c.l.b16 %v44
  %v91 = vunpack.c.h.b16 %v44
  %v92 = vunpack.c.l.b16 %v45
  %v93 = vunpack.c.l.b16 %v46
  %v94 = vunpack.c.h.b16 %v46
  %v95 = vunpack.c.l.b16 %v47
  %v96 = vunpack.c.l.b16 %v48
  %v97 = vunpack.c.h.b16 %v48
  %v98 = vunpack.c.l.b16 %v49
  %v99 = vunpack.c.l.b16 %v50
  %v100 = vunpack.c.h.b16 %v50
  %v101 = vunpack.c.l.b16 %v51
  %v102 = vunpack.c.l.b16 %v52
  %v103 = vunpack.c.h.b16 %v52
  %v104 = vunpack.c.l.b16 %v53
  %v105 = vunpack.c.l.b16 %v54
  %v106 = vunpack.c.h.b16 %v54
  %v107 = vunpack.c.l.b16 %v55
  %v108 = vunpack.c.l.b16 %v56
  %v109 = vunpack.c.h.b16 %v56
  %v110 = vunpack.c.l.b16 %v57
  %v111 = vpack.c.b16 %v90, %v87
  %v112 = vpack.c.b16 %v91, %v88
  %v113 = vpack.c.b16 %v92, %v89
  %v114 = vpack.c.b16 %v96, %v93
  %v115 = vpack.c.b16 %v97, %v94
  %v116 = vpack.c.b16 %v98, %v95
  %v117 = vpack.c.b16 %v102, %v99
  %v118 = vpack.c.b16 %v103, %v100
  %v119 = vpack.c.b16 %v104, %v101
  %v120 = vpack.c.b16 %v108, %v105
  %v121 = vpack.c.b16 %v109, %v106
  %v122 = vpack.c.b16 %v110, %v107
  %vm135 = vcmask 523264
  %v137 = vsel %vm135, %v68, 0
  %v140 = vsel %vm135, %v69, 0
  %v143 = vsel %vm135, %v70, 0
  %145 = vmatpush.bf16.msra.mxu0 0
  %146 = vmatpush.bf16.msra.mxu0 0
  %147 = vmatpush.bf16.msra.mxu0 0
  %148 = vmatpush.bf16.msra.mxu0 0
  %149 = vmatpush.bf16.msra.mxu0 %v120
  %150 = vmatpush.bf16.msra.mxu0 %v117
  %151 = vmatpush.bf16.msra.mxu0 %v114
  %152 = vmatpush.bf16.msra.mxu0 %v111
  %153 = vmatmul.bf16.gmra.mxu0 %v137
  %v154 = vpop.f32.mrf.mxu0
  %v155 = vadd.f32 0.0, %v154
  %v156 = vpop.f32.mrf.mxu0
  %v157 = vadd.f32 0.0, %v156
  %158 = vmatmul.bf16.gmra.mxu0 %v140
  %v159 = vpop.f32.mrf.mxu0
  %v160 = vadd.f32 0.0, %v159
  %v161 = vpop.f32.mrf.mxu0
  %v162 = vadd.f32 0.0, %v161
  %163 = vmatmul.bf16.gmra.mxu0 %v143
  %v164 = vpop.f32.mrf.mxu0
  %v165 = vadd.f32 0.0, %v164
  %v166 = vpop.f32.mrf.mxu0
  %167 = vdwg.mxu0
  %168 = vmatpush.bf16.msra.mxu0 0
  %169 = vmatpush.bf16.msra.mxu0 0
  %170 = vmatpush.bf16.msra.mxu0 0
  %171 = vmatpush.bf16.msra.mxu0 0
  %172 = vmatpush.bf16.msra.mxu0 %v121
  %173 = vmatpush.bf16.msra.mxu0 %v118
  %174 = vmatpush.bf16.msra.mxu0 %v115
  %175 = vmatpush.bf16.msra.mxu0 %v112
  %176 = vmatmul.bf16.gmra.mxu0 %v137
  %v177 = vpop.f32.mrf.mxu0
  %v178 = vadd.f32 0.0, %v177
  %v179 = vpop.f32.mrf.mxu0
  %v180 = vadd.f32 0.0, %v179
  %181 = vmatmul.bf16.gmra.mxu0 %v140
  %v182 = vpop.f32.mrf.mxu0
  %v183 = vadd.f32 0.0, %v182
  %v184 = vpop.f32.mrf.mxu0
  %v185 = vadd.f32 0.0, %v184
  %186 = vmatmul.bf16.gmra.mxu0 %v143
  %v187 = vpop.f32.mrf.mxu0
  %v188 = vadd.f32 0.0, %v187
  %v189 = vpop.f32.mrf.mxu0
  %190 = vdwg.mxu0
  %191 = vmatpush.bf16.msra.mxu0 0
  %192 = vmatpush.bf16.msra.mxu0 0
  %193 = vmatpush.bf16.msra.mxu0 0
  %194 = vmatpush.bf16.msra.mxu0 0
  %195 = vmatpush.bf16.msra.mxu0 %v122
  %196 = vmatpush.bf16.msra.mxu0 %v119
  %197 = vmatpush.bf16.msra.mxu0 %v116
  %198 = vmatpush.bf16.msra.mxu0 %v113
  %199 = vmatmul.bf16.gmra.mxu0 %v137
  %v200 = vpop.f32.mrf.mxu0
  %v201 = vadd.f32 0.0, %v200
  %v202 = vpop.f32.mrf.mxu0
  %v203 = vadd.f32 0.0, %v202
  %204 = vmatmul.bf16.gmra.mxu0 %v140
  %v205 = vpop.f32.mrf.mxu0
  %v206 = vadd.f32 0.0, %v205
  %v207 = vpop.f32.mrf.mxu0
  %v208 = vadd.f32 0.0, %v207
  %209 = vmatmul.bf16.gmra.mxu0 %v143
  %v210 = vpop.f32.mrf.mxu0
  %v211 = vadd.f32 0.0, %v210
  %v212 = vpop.f32.mrf.mxu0
  %213 = vdwg.mxu0
  %v214 = vld [vmem:[%s8] sm:$0xff]
  %v215 = vld [vmem:[%s8 + $0x8] sm:$0xff]
  %v216 = vld [vmem:[%s8 + $0x10] sm:$0xff]
  %v217 = vld [vmem:[%s8 + $0x18] sm:$0xff]
  %v218 = vld [vmem:[%s8 + $0x20] sm:$0x3f]
  %vm224 = vcmask 1046528
  %v225 = vrot.slane %v178, 1
  %v226 = vrot.slane %v180, 1
  %v227 = vsel %vm224, %v225, %v226
  %v228 = vrot.slane %v183, 1
  %v229 = vsel %vm224, %v226, %v228
  %v230 = vrot.slane %v185, 1
  %v231 = vsel %vm224, %v228, %v230
  %v232 = vrot.slane %v188, 1
  %v233 = vsel %vm224, %v230, %v232
  %v239 = vadd.f32 %v155, %v227
  %v240 = vadd.f32 %v157, %v229
  %v241 = vadd.f32 %v160, %v231
  %v242 = vadd.f32 %v162, %v233
  %v243 = vadd.f32 %v165, %v232
  %vm249 = vcmask 1045504
  %v250 = vrot.slane %v201, 2
  %v251 = vrot.slane %v203, 2
  %v252 = vsel %vm249, %v250, %v251
  %v253 = vrot.slane %v206, 2
  %v254 = vsel %vm249, %v251, %v253
  %v255 = vrot.slane %v208, 2
  %v256 = vsel %vm249, %v253, %v255
  %v257 = vrot.slane %v211, 2
  %v258 = vsel %vm249, %v255, %v257
  %v264 = vadd.f32 %v239, %v252
  %v265 = vadd.f32 %v240, %v254
  %v266 = vadd.f32 %v241, %v256
  %v267 = vadd.f32 %v242, %v258
  %v268 = vadd.f32 %v243, %v257
  %270 = vset.pattern.permute.xlu0 0
  %271 = vperm.xlu0 %270, %v214
  %v272 = vpop.permute.xlu0 %271
  %275 = vset.pattern.permute.xlu0 0
  %276 = vperm.xlu0 %275, %v215
  %v277 = vpop.permute.xlu0 %276
  %280 = vset.pattern.permute.xlu0 0
  %281 = vperm.xlu0 %280, %v216
  %v282 = vpop.permute.xlu0 %281
  %285 = vset.pattern.permute.xlu0 0
  %286 = vperm.xlu0 %285, %v217
  %v287 = vpop.permute.xlu0 %286
  %290 = vset.pattern.permute.xlu0 0
  %291 = vperm.xlu0 %290, %v218
  %v292 = vpop.permute.xlu0 %291
  %v294 = vmul.f32 %v264, %v272
  %v295 = vmul.f32 %v265, %v277
  %v296 = vmul.f32 %v266, %v282
  %v297 = vmul.f32 %v267, %v287
  %v298 = vmul.f32 %v268, %v292
  %v299 = vlaneseq
  %v300 = vshrl.u32 %v299, 7
  %vm301 = vcmp.eq.s32.totalorder %v300, 0
  %v302 = vadd.f32 %v294, %v295
  %v303 = vadd.f32 %v302, %v296
  %v304 = vadd.f32 %v303, %v297
  %v305 = vsel %vm249, %v298, 0.0
  %v306 = vadd.f32 %v304, %v305
  %v307 = vrot.slane %v306, 4
  %v308 = vadd.f32 %v306, %v307
  %v309 = vrot.slane %v308, 2
  %v310 = vadd.f32 %v308, %v309
  %v311 = vrot.slane %v310, 1
  %v312 = vadd.f32 %v310, %v311
  %v313 = vmul.f32 %v294, %v294
  %v314 = vmul.f32 %v295, %v295
  %v315 = vmul.f32 %v296, %v296
  %v316 = vmul.f32 %v297, %v297
  %v317 = vmul.f32 %v298, %v298
  %v318 = vadd.f32 %v313, %v314
  %v319 = vadd.f32 %v318, %v315
  %v320 = vadd.f32 %v319, %v316
  %v321 = vsel %vm249, %v317, 0.0
  %v322 = vadd.f32 %v320, %v321
  %v323 = vrot.slane %v322, 4
  %v324 = vadd.f32 %v322, %v323
  %v325 = vrot.slane %v324, 2
  %v326 = vadd.f32 %v324, %v325
  %v327 = vrot.slane %v326, 1
  %v328 = vadd.f32 %v326, %v327
  %v329 = vsel %vm301, %v312, %v328
  %v330 = vld [vmem:[%s5] sm:$0xff]
  %v331 = vld [vmem:[%s5 + $0x8] sm:$0xff]
  %v332 = vld [vmem:[%s5 + $0x10] sm:$0xff]
  %v333 = vld [vmem:[%s5 + $0x18] sm:$0xff]
  %v334 = vld [vmem:[%s5 + $0x20] sm:$0xff]
  %v335 = vld [vmem:[%s5 + $0x28] sm:$0xff]
  %v336 = vld [vmem:[%s5 + $0x30] sm:$0xff]
  %v337 = vld [vmem:[%s5 + $0x38] sm:$0xff]
  %v338 = vld [vmem:[%s5 + $0x40] sm:$0xff]
  %v339 = vld [vmem:[%s5 + $0x48] sm:$0xff]
  %v340 = vld [vmem:[%s5 + $0x50] sm:$0xff]
  %v341 = vld [vmem:[%s5 + $0x58] sm:$0xff]
  %v342 = vld [vmem:[%s5 + $0x60] sm:$0xff]
  %v343 = vld [vmem:[%s5 + $0x68] sm:$0xff]
  %v344 = vld [vmem:[%s5 + $0x70] sm:$0xff]
  %v345 = vld [vmem:[%s5 + $0x78] sm:$0xff]
  %346 = vmatpush.msra.mxu0 %v345
  %347 = vmatpush.msra.mxu0 %v344
  %348 = vmatpush.msra.mxu0 %v343
  %349 = vmatpush.msra.mxu0 %v342
  %350 = vmatpush.msra.mxu0 %v341
  %351 = vmatpush.msra.mxu0 %v340
  %352 = vmatpush.msra.mxu0 %v339
  %353 = vmatpush.msra.mxu0 %v338
  %354 = vmatpush.msra.mxu0 %v337
  %355 = vmatpush.msra.mxu0 %v336
  %356 = vmatpush.msra.mxu0 %v335
  %357 = vmatpush.msra.mxu0 %v334
  %358 = vmatpush.msra.mxu0 %v333
  %359 = vmatpush.msra.mxu0 %v332
  %360 = vmatpush.msra.mxu0 %v331
  %361 = vmatpush.msra.mxu0 %v330
  %362 = vmatmul.f32.gmra.mxu0 %v329
  %v363 = vpop.f32.mrf.mxu0
  %v364 = vadd.f32 0.0, %v363
  %365 = vdwg.mxu0
  %v366 = vmul.f32 %v364, 0.001953125
  %v367 = vmul.f32 %v366, %v366
  %v369 = vrot.slane %v367, 7
  %v371 = vsub.f32 %v366, %v369
  %v372 = vmax.f32 %v371, 0.0
  %v373 = vadd.f32 %v372, 1e-05
  %v374 = vrsqrt.pop %v373
  %v375 = vmul.f32 %v374, %v373
  %v376 = vmul.f32 %v375, %v374
  %v377 = vmul.f32 0.5, %v376
  %v378 = vsub.f32 1.5, %v377
  %v379 = vmul.f32 %v374, %v378
  %vm380 = vweird.f32 %v373
  %vm381 = vweird.f32 %v374
  %vm382 = vmor %vm380, %vm381
  %v383 = vsel %vm382, %v374, %v379
  %v384 = vld [vmem:[%s3] sm:$0x1]
  %386 = vst [vmem:[#allocation1] sm:$0xff] %v383
  %s387 = scalar_lea.vmem [#allocation1], 1
  %v388 = vld [vmem:[%s387] ss:$9 sm:$0xff]
  %v390 = vmul.f32 %v384, %v388
  %v391 = vld [vmem:[%s4] sm:$0x1]
  %v392 = vmul.f32 %v390, %v366
  %v393 = vsub.f32 %v391, %v392
  %v395 = vperm.slane %v390, 0
  %v398 = vperm.slane %v393, 0
  %v400 = vsel %vm301, %v395, %v398
  %v401 = vld [vmem:[%s6] sm:$0xff]
  %vm402 = vcmask 64512
  %v404 = vsel %vm402, %v400, 0
  %406 = vmatpush.msra.mxu0 0.0
  %407 = vmatpush.msra.mxu0 0.0
  %408 = vmatpush.msra.mxu0 0.0
  %409 = vmatpush.msra.mxu0 0.0
  %410 = vmatpush.msra.mxu0 0.0
  %411 = vmatpush.msra.mxu0 0.0
  %412 = vmatpush.msra.mxu0 0.0
  %413 = vmatpush.msra.mxu0 0.0
  %414 = vmatpush.msra.mxu0 0.0
  %415 = vmatpush.msra.mxu0 0.0
  %416 = vmatpush.msra.mxu0 0.0
  %417 = vmatpush.msra.mxu0 0.0
  %418 = vmatpush.msra.mxu0 0.0
  %419 = vmatpush.msra.mxu0 0.0
  %420 = vmatpush.msra.mxu0 0.0
  %421 = vmatpush.msra.mxu0 %v401
  %422 = vmatmul.f32.gmra.mxu0 %v404
  %v423 = vpop.f32.mrf.mxu0
  %v424 = vadd.f32 0.0, %v423
  %425 = vdwg.mxu0
  %s426 = sld [smem:[#allocation3]]
  %v427 = vperm.slane %v424, 0
  %v428 = vmul.f32 %v294, %v427
  %v429 = vmul.f32 %v295, %v427
  %v430 = vmul.f32 %v296, %v427
  %v431 = vmul.f32 %v297, %v427
  %v432 = vmul.f32 %v298, %v427
  %v433 = vperm.slane %v424, 1
  %v434 = vadd.f32 %v428, %v433
  %v435 = vadd.f32 %v429, %v433
  %v436 = vadd.f32 %v430, %v433
  %v437 = vadd.f32 %v431, %v433
  %v438 = vadd.f32 %v432, %v433
  %vm439 = vcmp.ge.f32.partialorder %v434, 0.0
  %vm440 = vcmp.ge.f32.partialorder %v435, 0.0
  %vm441 = vcmp.ge.f32.partialorder %v436, 0.0
  %vm442 = vcmp.ge.f32.partialorder %v437, 0.0
  %vm443 = vcmp.ge.f32.partialorder %v438, 0.0
  %v444 = vstv %s426
  %v445 = vmul.f32 %v444, %v434
  %v446 = vmul.f32 %v444, %v435
  %v447 = vmul.f32 %v444, %v436
  %v448 = vmul.f32 %v444, %v437
  %v449 = vmul.f32 %v444, %v438
  %v450 = vsel %vm439, %v434, %v445
  %v451 = vsel %vm440, %v435, %v446
  %v452 = vsel %vm441, %v436, %v447
  %v453 = vsel %vm442, %v437, %v448
  %v454 = vsel %vm443, %v438, %v449
  %v455 = vmul.f32 %v450, %v272
  %v456 = vmul.f32 %v451, %v277
  %v457 = vmul.f32 %v452, %v282
  %v458 = vmul.f32 %v453, %v287
  %v459 = vmul.f32 %v454, %v292
  %460 = vst [vmem:[#allocation2] sm:$0xf] 0
  %461 = vst [vmem:[#allocation2 + $0x4] sm:$0xf] 0
  %462 = vst [vmem:[#allocation2 + $0x8] sm:$0xf] 0
  %463 = vst [vmem:[#allocation2 + $0xc] sm:$0xf] 0
  %464 = vst [vmem:[#allocation2 + $0x10] sm:$0xf] 0
  %v465 = vpack.c.bf16 %v455, %v455
  %v466 = vpack.c.bf16 %v456, %v456
  %v467 = vpack.c.bf16 %v457, %v457
  %v468 = vpack.c.bf16 %v458, %v458
  %v469 = vpack.c.bf16 %v459, %v459
  %vm470 = vsmask.f32 256
  %vm471 = vsmask.f32 4368
  %vm472 = vmor %vm470, %vm471
  %v474 = vshrl.u32 %v465, 16
  %v476 = vrot.slane %v474, 7
  %v477 = vshll.u32 %v465, 16
  %v479 = vor.u32 %v476, %v477
  %v480 = vrot.slane %v476, 4
  %v482 = vshrl.u32 %v466, 16
  %v484 = vrot.slane %v482, 7
  %v485 = vshll.u32 %v466, 16
  %v487 = vor.u32 %v484, %v485
  %v488 = vsel %vm472, %v480, %v487
  %v489 = vrot.slane %v484, 4
  %v491 = vshrl.u32 %v467, 16
  %v493 = vrot.slane %v491, 7
  %v494 = vshll.u32 %v467, 16
  %v496 = vor.u32 %v493, %v494
  %v497 = vsel %vm472, %v489, %v496
  %v498 = vrot.slane %v493, 4
  %v500 = vshrl.u32 %v468, 16
  %v502 = vrot.slane %v500, 7
  %v503 = vshll.u32 %v468, 16
  %v505 = vor.u32 %v502, %v503
  %v506 = vsel %vm472, %v498, %v505
  %v507 = vrot.slane %v502, 4
  %v509 = vshrl.u32 %v469, 16
  %v511 = vrot.slane %v509, 7
  %v512 = vshll.u32 %v469, 16
  %v514 = vor.u32 %v511, %v512
  %v515 = vsel %vm472, %v507, %v514
  %vm521 = vcmask 1043456
  %vm522 = vsmask.f32 7938
  %vm523 = vmand %vm521, %vm522
  %v524 = vld [vmem:[#allocation2] sm:$0xf]
  %v525 = vsel %vm523, %v479, %v524
  %526 = vst [vmem:[#allocation2] sm:$0xf] %v525
  %527 = vst [vmem:[#allocation2 + $0x4] sm:$0xf] %v488
  %528 = vst [vmem:[#allocation2 + $0x8] sm:$0xf] %v497
  %529 = vst [vmem:[#allocation2 + $0xc] sm:$0xf] %v506
  %vm530 = vsmask.f32 3328
  %vm531 = vmand %vm521, %vm530
  %v532 = vld [vmem:[#allocation2 + $0x10] sm:$0xf]
  %v533 = vsel %vm531, %v515, %v532
  %534 = vst [vmem:[#allocation2 + $0x10] sm:$0xf] %v533
  %v535 = vld [vmem:[#allocation2] sm:$0xf]
  %v536 = vld [vmem:[#allocation2 + $0x4] sm:$0xf]
  %v537 = vld [vmem:[#allocation2 + $0x8] sm:$0xf]
  %v538 = vld [vmem:[#allocation2 + $0xc] sm:$0xf]
  %v539 = vld [vmem:[#allocation2 + $0x10] sm:$0xf]
  %v540 = vld [vmem:[%s2] sm:$0xff]
  %v541 = vld [vmem:[%s2 + $0x8] sm:$0xf]
  %v542 = vld [vmem:[%s2 + $0xc] sm:$0xff]
  %v543 = vld [vmem:[%s2 + $0x14] sm:$0xf]
  %v544 = vld [vmem:[%s2 + $0x18] sm:$0xff]
  %v545 = vld [vmem:[%s2 + $0x20] sm:$0xf]
  %v546 = vld [vmem:[%s2 + $0x24] sm:$0xff]
  %v547 = vld [vmem:[%s2 + $0x2c] sm:$0xf]
  %v548 = vld [vmem:[%s2 + $0x30] sm:$0xff]
  %v549 = vld [vmem:[%s2 + $0x38] sm:$0xf]
  %v550 = vld [vmem:[%s2 + $0x3c] sm:$0xff]
  %v551 = vld [vmem:[%s2 + $0x44] sm:$0xf]
  %v552 = vld [vmem:[%s2 + $0x48] sm:$0xff]
  %v553 = vld [vmem:[%s2 + $0x50] sm:$0xf]
  %v554 = vld [vmem:[%s2 + $0x54] sm:$0xff]
  %v555 = vld [vmem:[%s2 + $0x5c] sm:$0xf]
  %v556 = vld [vmem:[%s2 + $0x60] sm:$0xff]
  %v557 = vld [vmem:[%s2 + $0x68] sm:$0xf]
  %v558 = vld [vmem:[%s2 + $0x6c] sm:$0xff]
  %v559 = vld [vmem:[%s2 + $0x74] sm:$0xf]
  %v560 = vld [vmem:[%s2 + $0x78] sm:$0xff]
  %v561 = vld [vmem:[%s2 + $0x80] sm:$0xf]
  %v562 = vld [vmem:[%s2 + $0x84] sm:$0xff]
  %v563 = vld [vmem:[%s2 + $0x8c] sm:$0xf]
  %v564 = vld [vmem:[%s2 + $0x90] sm:$0xff]
  %v565 = vld [vmem:[%s2 + $0x98] sm:$0xf]
  %v566 = vld [vmem:[%s2 + $0x9c] sm:$0xff]
  %v567 = vld [vmem:[%s2 + $0xa4] sm:$0xf]
  %v568 = vld [vmem:[%s2 + $0xa8] sm:$0xff]
  %v569 = vld [vmem:[%s2 + $0xb0] sm:$0xf]
  %v570 = vld [vmem:[%s2 + $0xb4] sm:$0xff]
  %v571 = vld [vmem:[%s2 + $0xbc] sm:$0xf]
  %v577 = vunpack.c.l.b16 %v535
  %v578 = vunpack.c.l.b16 %v536
  %v579 = vunpack.c.l.b16 %v537
  %v580 = vunpack.c.l.b16 %v538
  %v581 = vunpack.c.l.b16 %v539
  %v582 = vpack.c.b16 %v578, %v577
  %v583 = vpack.c.b16 %v580, %v579
  %v584 = vpack.c.b16 %v581, %v581
  %v620 = vunpack.c.l.b16 %v540
  %v621 = vunpack.c.h.b16 %v540
  %v622 = vunpack.c.l.b16 %v541
  %v623 = vunpack.c.l.b16 %v542
  %v624 = vunpack.c.h.b16 %v542
  %v625 = vunpack.c.l.b16 %v543
  %v626 = vunpack.c.l.b16 %v544
  %v627 = vunpack.c.h.b16 %v544
  %v628 = vunpack.c.l.b16 %v545
  %v629 = vunpack.c.l.b16 %v546
  %v630 = vunpack.c.h.b16 %v546
  %v631 = vunpack.c.l.b16 %v547
  %v632 = vunpack.c.l.b16 %v548
  %v633 = vunpack.c.h.b16 %v548
  %v634 = vunpack.c.l.b16 %v549
  %v635 = vunpack.c.l.b16 %v550
  %v636 = vunpack.c.h.b16 %v550
  %v637 = vunpack.c.l.b16 %v551
  %v638 = vunpack.c.l.b16 %v552
  %v639 = vunpack.c.h.b16 %v552
  %v640 = vunpack.c.l.b16 %v553
  %v641 = vunpack.c.l.b16 %v554
  %v642 = vunpack.c.h.b16 %v554
  %v643 = vunpack.c.l.b16 %v555
  %v644 = vunpack.c.l.b16 %v556
  %v645 = vunpack.c.h.b16 %v556
  %v646 = vunpack.c.l.b16 %v557
  %v647 = vunpack.c.l.b16 %v558
  %v648 = vunpack.c.h.b16 %v558
  %v649 = vunpack.c.l.b16 %v559
  %v650 = vunpack.c.l.b16 %v560
  %v651 = vunpack.c.h.b16 %v560
  %v652 = vunpack.c.l.b16 %v561
  %v653 = vunpack.c.l.b16 %v562
  %v654 = vunpack.c.h.b16 %v562
  %v655 = vunpack.c.l.b16 %v563
  %v656 = vunpack.c.l.b16 %v564
  %v657 = vunpack.c.h.b16 %v564
  %v658 = vunpack.c.l.b16 %v565
  %v659 = vunpack.c.l.b16 %v566
  %v660 = vunpack.c.h.b16 %v566
  %v661 = vunpack.c.l.b16 %v567
  %v662 = vunpack.c.l.b16 %v568
  %v663 = vunpack.c.h.b16 %v568
  %v664 = vunpack.c.l.b16 %v569
  %v665 = vunpack.c.l.b16 %v570
  %v666 = vunpack.c.h.b16 %v570
  %v667 = vunpack.c.l.b16 %v571
  %v668 = vpack.c.b16 %v623, %v620
  %v669 = vpack.c.b16 %v624, %v621
  %v670 = vpack.c.b16 %v625, %v622
  %v671 = vpack.c.b16 %v629, %v626
  %v672 = vpack.c.b16 %v630, %v627
  %v673 = vpack.c.b16 %v631, %v628
  %v674 = vpack.c.b16 %v635, %v632
  %v675 = vpack.c.b16 %v636, %v633
  %v676 = vpack.c.b16 %v637, %v634
  %v677 = vpack.c.b16 %v641, %v638
  %v678 = vpack.c.b16 %v642, %v639
  %v679 = vpack.c.b16 %v643, %v640
  %v680 = vpack.c.b16 %v647, %v644
  %v681 = vpack.c.b16 %v648, %v645
  %v682 = vpack.c.b16 %v649, %v646
  %v683 = vpack.c.b16 %v653, %v650
  %v684 = vpack.c.b16 %v654, %v651
  %v685 = vpack.c.b16 %v655, %v652
  %v686 = vpack.c.b16 %v659, %v656
  %v687 = vpack.c.b16 %v660, %v657
  %v688 = vpack.c.b16 %v661, %v658
  %v689 = vpack.c.b16 %v665, %v662
  %v690 = vpack.c.b16 %v666, %v663
  %v691 = vpack.c.b16 %v667, %v664
  %716 = vmatpush.bf16.msra.mxu0 %v689
  %717 = vmatpush.bf16.msra.mxu0 %v686
  %718 = vmatpush.bf16.msra.mxu0 %v683
  %719 = vmatpush.bf16.msra.mxu0 %v680
  %720 = vmatpush.bf16.msra.mxu0 %v677
  %721 = vmatpush.bf16.msra.mxu0 %v674
  %722 = vmatpush.bf16.msra.mxu0 %v671
  %723 = vmatpush.bf16.msra.mxu0 %v668
  %724 = vmatmul.bf16.gmra.mxu0 %v582
  %v725 = vpop.f32.mrf.mxu0
  %v726 = vadd.f32 0.0, %v725
  %v727 = vpop.f32.mrf.mxu0
  %v728 = vadd.f32 0.0, %v727
  %729 = vmatmul.bf16.gmra.mxu0 %v583
  %v730 = vpop.f32.mrf.mxu0
  %v731 = vadd.f32 0.0, %v730
  %v732 = vpop.f32.mrf.mxu0
  %v733 = vadd.f32 0.0, %v732
  %734 = vmatmul.bf16.gmra.mxu0 %v584
  %v735 = vpop.f32.mrf.mxu0
  %v736 = vadd.f32 0.0, %v735
  %v737 = vpop.f32.mrf.mxu0
  %738 = vdwg.mxu0
  %739 = vmatpush.bf16.msra.mxu0 %v690
  %740 = vmatpush.bf16.msra.mxu0 %v687
  %741 = vmatpush.bf16.msra.mxu0 %v684
  %742 = vmatpush.bf16.msra.mxu0 %v681
  %743 = vmatpush.bf16.msra.mxu0 %v678
  %744 = vmatpush.bf16.msra.mxu0 %v675
  %745 = vmatpush.bf16.msra.mxu0 %v672
  %746 = vmatpush.bf16.msra.mxu0 %v669
  %747 = vmatmul.bf16.gmra.mxu0 %v582
  %v748 = vpop.f32.mrf.mxu0
  %v749 = vadd.f32 0.0, %v748
  %v750 = vpop.f32.mrf.mxu0
  %v751 = vadd.f32 0.0, %v750
  %752 = vmatmul.bf16.gmra.mxu0 %v583
  %v753 = vpop.f32.mrf.mxu0
  %v754 = vadd.f32 0.0, %v753
  %v755 = vpop.f32.mrf.mxu0
  %v756 = vadd.f32 0.0, %v755
  %757 = vmatmul.bf16.gmra.mxu0 %v584
  %v758 = vpop.f32.mrf.mxu0
  %v759 = vadd.f32 0.0, %v758
  %v760 = vpop.f32.mrf.mxu0
  %761 = vdwg.mxu0
  %762 = vmatpush.bf16.msra.mxu0 %v691
  %763 = vmatpush.bf16.msra.mxu0 %v688
  %764 = vmatpush.bf16.msra.mxu0 %v685
  %765 = vmatpush.bf16.msra.mxu0 %v682
  %766 = vmatpush.bf16.msra.mxu0 %v679
  %767 = vmatpush.bf16.msra.mxu0 %v676
  %768 = vmatpush.bf16.msra.mxu0 %v673
  %769 = vmatpush.bf16.msra.mxu0 %v670
  %770 = vmatmul.bf16.gmra.mxu0 %v582
  %v771 = vpop.f32.mrf.mxu0
  %v772 = vadd.f32 0.0, %v771
  %v773 = vpop.f32.mrf.mxu0
  %v774 = vadd.f32 0.0, %v773
  %775 = vmatmul.bf16.gmra.mxu0 %v583
  %v776 = vpop.f32.mrf.mxu0
  %v777 = vadd.f32 0.0, %v776
  %v778 = vpop.f32.mrf.mxu0
  %v779 = vadd.f32 0.0, %v778
  %780 = vmatmul.bf16.gmra.mxu0 %v584
  %v781 = vpop.f32.mrf.mxu0
  %v782 = vadd.f32 0.0, %v781
  %v783 = vpop.f32.mrf.mxu0
  %784 = vdwg.mxu0
  %v790 = vrot.slane %v749, 1
  %v791 = vrot.slane %v751, 1
  %v792 = vsel %vm224, %v790, %v791
  %v793 = vrot.slane %v754, 1
  %v794 = vsel %vm224, %v791, %v793
  %v795 = vrot.slane %v756, 1
  %v796 = vsel %vm224, %v793, %v795
  %v797 = vrot.slane %v759, 1
  %v798 = vsel %vm224, %v795, %v797
  %v804 = vadd.f32 %v726, %v792
  %v805 = vadd.f32 %v728, %v794
  %v806 = vadd.f32 %v731, %v796
  %v807 = vadd.f32 %v733, %v798
  %v808 = vadd.f32 %v736, %v797
  %v814 = vrot.slane %v772, 2
  %v815 = vrot.slane %v774, 2
  %v816 = vsel %vm249, %v814, %v815
  %v817 = vrot.slane %v777, 2
  %v818 = vsel %vm249, %v815, %v817
  %v819 = vrot.slane %v779, 2
  %v820 = vsel %vm249, %v817, %v819
  %v821 = vrot.slane %v782, 2
  %v822 = vsel %vm249, %v819, %v821
  %v828 = vadd.f32 %v804, %v816
  %v829 = vadd.f32 %v805, %v818
  %v830 = vadd.f32 %v806, %v820
  %v831 = vadd.f32 %v807, %v822
  %v832 = vadd.f32 %v808, %v821
  %v833 = vld [vmem:[%s7] sm:$0x1]
  %v835 = vperm.slane %v833, 0
  %v837 = vadd.f32 %v828, %v835
  %v838 = vadd.f32 %v829, %v835
  %v839 = vadd.f32 %v830, %v835
  %v840 = vadd.f32 %v831, %v835
  %v841 = vadd.f32 %v832, %v835
  %842 = vst [vmem:[%s10] sm:$0xff] %v837
  %843 = vst [vmem:[%s10 + $0x8] sm:$0xff] %v838
  %844 = vst [vmem:[%s10 + $0x10] sm:$0xff] %v839
  %845 = vst [vmem:[%s10 + $0x18] sm:$0xff] %v840
  %846 = vst [vmem:[%s10 + $0x20] sm:$0x3f] %v841
  // Predicated region
  $region42: #{generator_block.1} parent=0 // pred_check
    _
  $region43: #{generator_block.1} parent=0 // pred_check_branch
    %848 = sbr.rel (0) target = $region45
  $region44: #{generator_block.1} parent=0 // pred_region
    _
  $region45: #{generator_block.1} parent=0 // pred_fallthru
    _
  // Predicated region
  $region46: #{generator_block.1} parent=0 // pred_check
    _
  $region47: #{generator_block.1} parent=0 // pred_check_branch
    %850 = sbr.rel (0) target = $region49
  $region48: #{generator_block.1} parent=0 // pred_region
    _
  $region49: #{generator_block.1} parent=0 // pred_fallthru
    _

</llo_original>
